<compile_context>
chip_gen: v7x
topology: tpu7x:2x2x1
jax: 0.10.0
libtpu: 0.0.40
codegen_flags: <defaults>
</compile_context>

<pallas_src>
import functools

import jax
import jax.numpy as jnp
from jax.experimental import pallas as pl
from jax.experimental.pallas import tpu as pltpu

HIDDEN = 64      # logical hidden width (as in the PyTorch module)
LANE = 128       # padded lane width used for all on-chip layouts


def dqn_mlp_kernel(x_ref, w_ref, b_ref, o_ref):
    # x_ref: (TB, 128) bf16   w_ref: (3, 128, 128) bf16   b_ref: (3, 128) f32
    x = x_ref[...]
    b = b_ref[...]                      # (3, 128) f32, tiny
    # fc1 + ReLU (bf16 MXU inputs, f32 accumulate / bias / ReLU)
    h1 = jnp.dot(x, w_ref[0], preferred_element_type=jnp.float32)
    h1 = jnp.maximum(h1 + b[0:1, :], 0.0)
    # fc2 + ReLU
    h2 = jnp.dot(h1.astype(jnp.bfloat16), w_ref[1],
                 preferred_element_type=jnp.float32)
    h2 = jnp.maximum(h2 + b[1:2, :], 0.0)
    # fc3 (raw Q-values, no activation) -> lane-dense f32 store
    q = jnp.dot(h2.astype(jnp.bfloat16), w_ref[2],
                preferred_element_type=jnp.float32) + b[2:3, :]
    o_ref[...] = q


def _pad_to(a, shape):
    return jnp.pad(a, [(0, s - d) for s, d in zip(shape, a.shape)])


def pack_params(params):
    """Pack (w1,b1,w2,b2,w3,b3) into one bf16 weight slab and one f32 bias slab."""
    w1, b1, w2, b2, w3, b3 = params
    w_slab = jnp.stack([
        _pad_to(w1, (LANE, LANE)),
        _pad_to(w2, (LANE, LANE)),
        _pad_to(w3, (LANE, LANE)),
    ]).astype(jnp.bfloat16)                       # (3, 128, 128)
    b_slab = jnp.stack([
        _pad_to(b1[0], (LANE,)),
        _pad_to(b2[0], (LANE,)),
        _pad_to(b3[0], (LANE,)),
    ]).astype(jnp.float32)                        # (3, 128)
    return w_slab, b_slab


@functools.partial(jax.jit, static_argnames=("output_size",))
def dqn_forward(x, w_slab, b_slab, *, output_size):
    B, in_size = x.shape
    # Batch tile: stream big batches in 256-row tiles; small batches in one tile.
    TB = 256 if B >= 256 else max(8, ((B + 7) // 8) * 8)
    B_pad = ((B + TB - 1) // TB) * TB

    # Lane-dense, zero-padded activations (zeros are inert through the padded
    # weight rows/cols, so semantics are unchanged).
    x_pad = jnp.zeros((B_pad, LANE), jnp.bfloat16)
    x_pad = x_pad.at[:B, :in_size].set(x.astype(jnp.bfloat16))

    flops = 2 * B * (in_size * HIDDEN + HIDDEN * HIDDEN + HIDDEN * output_size)
    bytes_accessed = (B_pad * LANE * 2            # x (bf16)
                      + 3 * LANE * LANE * 2       # weights (bf16)
                      + 3 * LANE * 4              # biases (f32)
                      + B_pad * LANE * 4)         # output (f32)

    out = pl.pallas_call(
        dqn_mlp_kernel,
        out_shape=jax.ShapeDtypeStruct((B_pad, LANE), jnp.float32),
        grid=(B_pad // TB,),
        in_specs=[
            pl.BlockSpec((TB, LANE), lambda i: (i, 0)),          # x: streams
            pl.BlockSpec((3, LANE, LANE), lambda i: (0, 0, 0)),  # weights: resident
            pl.BlockSpec((3, LANE), lambda i: (0, 0)),           # biases: resident
        ],
        out_specs=pl.BlockSpec((TB, LANE), lambda i: (i, 0)),
        compiler_params=pltpu.CompilerParams(
            dimension_semantics=("parallel",)),
        cost_estimate=pl.CostEstimate(
            flops=flops, transcendentals=0, bytes_accessed=bytes_accessed),
    )(x_pad, w_slab, b_slab)

    return out[:B, :output_size]


def init_params(key, input_size, output_size):
    """Kaiming-uniform-ish init matching PyTorch Linear shapes (stored as x@W+b)."""
    ks = jax.random.split(key, 6)

    def linear(kw, kb, fan_in, fan_out):
        bound = 1.0 / jnp.sqrt(fan_in)
        w = jax.random.uniform(kw, (fan_in, fan_out), jnp.float32, -bound, bound)
        b = jax.random.uniform(kb, (1, fan_out), jnp.float32, -bound, bound)
        return w, b

    w1, b1 = linear(ks[0], ks[1], input_size, HIDDEN)
    w2, b2 = linear(ks[2], ks[3], HIDDEN, HIDDEN)
    w3, b3 = linear(ks[4], ks[5], HIDDEN, output_size)
    return (w1, b1, w2, b2, w3, b3)


def reference_forward(x, params):
    """Same mixed precision as the kernel: bf16 MXU inputs, f32 accumulate/ReLU."""
    w1, b1, w2, b2, w3, b3 = params
    bf, f32 = jnp.bfloat16, jnp.float32
    h1 = jnp.maximum(
        jnp.dot(x.astype(bf), w1.astype(bf), preferred_element_type=f32) + b1, 0.0)
    h2 = jnp.maximum(
        jnp.dot(h1.astype(bf), w2.astype(bf), preferred_element_type=f32) + b2, 0.0)
    return jnp.dot(h2.astype(bf), w3.astype(bf), preferred_element_type=f32) + b3


if __name__ == "__main__":
    key = jax.random.PRNGKey(0)
    k_params, k_x = jax.random.split(key)

    batch = 8
    input_size = 16   # state size
    output_size = 4   # action size

    params = init_params(k_params, input_size, output_size)
    w_slab, b_slab = pack_params(params)
    x = jax.random.normal(k_x, (batch, input_size), jnp.float32)

    q = dqn_forward(x, w_slab, b_slab, output_size=output_size)
    q = jax.block_until_ready(q)

    q_ref = reference_forward(x, params)
    assert q.shape == (batch, output_size)
    assert jnp.allclose(q, q_ref, atol=1e-4, rtol=1e-4), (
        f"max abs err {jnp.max(jnp.abs(q - q_ref))}")

    print("KERNEL_OK")
</pallas_src>

<mosaic_0001>
module attributes {stable_mosaic.version = 11 : i64} {
  func.func @dqn_mlp_kernel(%arg0: i32, %arg1: memref<8x128xbf16, #tpu.memory_space<vmem>>, %arg2: memref<3x128x128xbf16, #tpu.memory_space<vmem>>, %arg3: memref<3x128xf32, #tpu.memory_space<vmem>>, %arg4: memref<8x128xf32, #tpu.memory_space<vmem>>) attributes {dimension_semantics = [#tpu.dimension_semantics<parallel>], iteration_bounds = array<i64: 1>, scalar_prefetch = 0 : i64, scratch_operands = 0 : i64, tpu.core_type = #tpu.core_type<tc>, window_params = [{transform_indices = @transform_0, window_bounds = array<i64: 8, 128>}, {pipeline_mode = #tpu.pipeline_mode<synchronous>, transform_indices = @transform_1, window_bounds = array<i64: 3, 128, 128>}, {pipeline_mode = #tpu.pipeline_mode<synchronous>, transform_indices = @transform_2, window_bounds = array<i64: 3, 128>}, {transform_indices = @transform_3, window_bounds = array<i64: 8, 128>}]} {
    %c0 = arith.constant 0 : index
    %c0_0 = arith.constant 0 : index
    %0 = vector.load %arg1[%c0, %c0_0] : memref<8x128xbf16, #tpu.memory_space<vmem>>, vector<8x128xbf16>
    %c0_1 = arith.constant 0 : index
    %c0_2 = arith.constant 0 : index
    %1 = vector.load %arg3[%c0_1, %c0_2] : memref<3x128xf32, #tpu.memory_space<vmem>>, vector<3x128xf32>
    %c0_3 = arith.constant 0 : index
    %c0_4 = arith.constant 0 : index
    %c0_5 = arith.constant 0 : index
    %2 = vector.load %arg2[%c0_3, %c0_4, %c0_5] : memref<3x128x128xbf16, #tpu.memory_space<vmem>>, vector<1x128x128xbf16>
    %3 = vector.shape_cast %2 : vector<1x128x128xbf16> to vector<128x128xbf16>
    %cst = arith.constant dense<0.000000e+00> : vector<8x128xf32>
    %4 = tpu.matmul %0, %3, %cst {dimension_numbers = #tpu.dot_dimension_numbers<[1], [0], [0], [1], [0, 0, 1, 1], [], []>} : vector<8x128xbf16>, vector<128x128xbf16>, vector<8x128xf32> -> vector<8x128xf32>
    %5 = vector.extract_strided_slice %1 {offsets = [0, 0], sizes = [1, 128], strides = [1, 1]} : vector<3x128xf32> to vector<1x128xf32>
    %6 = vector.broadcast %5 : vector<1x128xf32> to vector<8x128xf32>
    %7 = arith.addf %4, %6 : vector<8x128xf32>
    %cst_6 = arith.constant 0.000000e+00 : f32
    %8 = vector.broadcast %cst_6 : f32 to vector<8x128xf32>
    %9 = arith.maximumf %7, %8 : vector<8x128xf32>
    %10 = arith.truncf %9 : vector<8x128xf32> to vector<8x128xbf16>
    %c1 = arith.constant 1 : index
    %c0_7 = arith.constant 0 : index
    %c0_8 = arith.constant 0 : index
    %11 = vector.load %arg2[%c1, %c0_7, %c0_8] : memref<3x128x128xbf16, #tpu.memory_space<vmem>>, vector<1x128x128xbf16>
    %12 = vector.shape_cast %11 : vector<1x128x128xbf16> to vector<128x128xbf16>
    %cst_9 = arith.constant dense<0.000000e+00> : vector<8x128xf32>
    %13 = tpu.matmul %10, %12, %cst_9 {dimension_numbers = #tpu.dot_dimension_numbers<[1], [0], [0], [1], [0, 0, 1, 1], [], []>} : vector<8x128xbf16>, vector<128x128xbf16>, vector<8x128xf32> -> vector<8x128xf32>
    %14 = vector.extract_strided_slice %1 {offsets = [1, 0], sizes = [1, 128], strides = [1, 1]} : vector<3x128xf32> to vector<1x128xf32>
    %15 = vector.broadcast %14 : vector<1x128xf32> to vector<8x128xf32>
    %16 = arith.addf %13, %15 : vector<8x128xf32>
    %cst_10 = arith.constant 0.000000e+00 : f32
    %17 = vector.broadcast %cst_10 : f32 to vector<8x128xf32>
    %18 = arith.maximumf %16, %17 : vector<8x128xf32>
    %19 = arith.truncf %18 : vector<8x128xf32> to vector<8x128xbf16>
    %c2 = arith.constant 2 : index
    %c0_11 = arith.constant 0 : index
    %c0_12 = arith.constant 0 : index
    %20 = vector.load %arg2[%c2, %c0_11, %c0_12] : memref<3x128x128xbf16, #tpu.memory_space<vmem>>, vector<1x128x128xbf16>
    %21 = vector.shape_cast %20 : vector<1x128x128xbf16> to vector<128x128xbf16>
    %cst_13 = arith.constant dense<0.000000e+00> : vector<8x128xf32>
    %22 = tpu.matmul %19, %21, %cst_13 {dimension_numbers = #tpu.dot_dimension_numbers<[1], [0], [0], [1], [0, 0, 1, 1], [], []>} : vector<8x128xbf16>, vector<128x128xbf16>, vector<8x128xf32> -> vector<8x128xf32>
    %23 = vector.extract_strided_slice %1 {offsets = [2, 0], sizes = [1, 128], strides = [1, 1]} : vector<3x128xf32> to vector<1x128xf32>
    %24 = vector.broadcast %23 : vector<1x128xf32> to vector<8x128xf32>
    %25 = arith.addf %22, %24 : vector<8x128xf32>
    %c0_14 = arith.constant 0 : index
    %c0_15 = arith.constant 0 : index
    %26 = vector.load %arg4[%c0_14, %c0_15] : memref<8x128xf32, #tpu.memory_space<vmem>>, vector<8x128xf32>
    tpu.vector_store %arg4[%c0_14, %c0_15], %25 {strides = array<i32>} : memref<8x128xf32, #tpu.memory_space<vmem>>, vector<8x128xf32>,
    return
  }
  func.func @transform_0(%arg0: i32) -> (i32, i32) {
    %c0_i32 = arith.constant 0 : i32
    %c0_i32_0 = arith.constant 0 : i32
    return %arg0, %c0_i32 : i32, i32
  }
  func.func @transform_1(%arg0: i32) -> (i32, i32, i32) {
    %c0_i32 = arith.constant 0 : i32
    %c0_i32_0 = arith.constant 0 : i32
    %c0_i32_1 = arith.constant 0 : i32
    %c0_i32_2 = arith.constant 0 : i32
    return %c0_i32, %c0_i32_0, %c0_i32_1 : i32, i32, i32
  }
  func.func @transform_2(%arg0: i32) -> (i32, i32) {
    %c0_i32 = arith.constant 0 : i32
    %c0_i32_0 = arith.constant 0 : i32
    %c0_i32_1 = arith.constant 0 : i32
    return %c0_i32, %c0_i32_0 : i32, i32
  }
  func.func @transform_3(%arg0: i32) -> (i32, i32) {
    %c0_i32 = arith.constant 0 : i32
    %c0_i32_0 = arith.constant 0 : i32
    return %arg0, %c0_i32 : i32, i32
  }
}

</mosaic_0001>

<llo_original>
// kernel: dqn_forward.1
$region0: #{dqn_forward.1}
  #allocation0 [shape = 'u32[]', space=smem, size = 0x4, offset = 0x4, fixed_abs, tag = 'smem constant byte address 0x4 - core index']
  #allocation1 [shape = 'u32[144,128]{1,0:T(1,128)}', space=vmem, size = 0x12000, scoped, tag = 'internal scratch']
  %s0 = inlined_call_operand.vmem [shape: bf16[8,128], index: 0, kind: input, shape index: {}]
  %s1 = inlined_call_operand.hbm [shape: bf16[3,128,128], index: 1, kind: input, shape index: {}]
  %s2 = inlined_call_operand.vmem [shape: f32[3,128], index: 2, kind: input, shape index: {}]
  %s3 = inlined_call_operand.vmem [shape: f32[8,128], index: 3, kind: output, shape index: {}]
  %s4 = sld [smem:[#allocation0]]
  $region26: #{dqn_forward.1} parent=0
    _
  %s6 = ssub.s32 1, %s4
  %s7 = scalar_select 0, %s6, %s4
  $region1: #{dqn_forward.1} parent=0
    #allocation2 [shape = 'u8[98304]{0}', space=vmem, size = 0x18000, scoped, tag = 'input window, operand 1, single buffered']
    #allocation3 [shape = 's32[1]{0}', space=sflag, size = 0x4, scoped, tag = 'scoped memory for dqn_forward.1']
    %8 = vsyncpa [#allocation3], 0
    // Predicated region
    $region2: #{dqn_forward.1} parent=1 // pred_check
      _
    $region3: #{dqn_forward.1} parent=1 // pred_check_branch
      %10 = sbr.rel (0) target = $region5
    $region4: #{dqn_forward.1} parent=1 // pred_region
      _
    $region5: #{dqn_forward.1} parent=1 // pred_fallthru
      _
    // Predicated region
    $region6: #{dqn_forward.1} parent=1 // pred_check
      _
    $region7: #{dqn_forward.1} parent=1 // pred_check_branch
      %12 = sbr.rel (0) target = $region9
    $region8: #{dqn_forward.1} parent=1 // pred_region
      %s14 = ssub.s32 3072, 3072
      %15 = vsyncadd [#allocation3], %s14
      %s16 = sshll.u32 [#allocation2], 4
      %s17 = int_to_ptr.vmem [resolvable:$true] %s16
      %22 = dma.hbm_to_vmem [thread:$0]  %s1, 3072, %s17, [#allocation3], 64, 64, 4
    $region9: #{dqn_forward.1} parent=1 // pred_fallthru
      _
    // Predicated region
    $region10: #{dqn_forward.1} parent=1 // pred_check
      _
    $region11: #{dqn_forward.1} parent=1 // pred_check_branch
      %24 = sbr.rel (0) target = $region13
    $region12: #{dqn_forward.1} parent=1 // pred_region
      _
    $region13: #{dqn_forward.1} parent=1 // pred_fallthru
      _
    // Predicated region
    $region14: #{dqn_forward.1} parent=1 // pred_check
      _
    $region15: #{dqn_forward.1} parent=1 // pred_check_branch
      %26 = sbr.rel (0) target = $region17
    $region16: #{dqn_forward.1} parent=1 // pred_region
      %27 = dma.done [#allocation3], 3072
    $region17: #{dqn_forward.1} parent=1 // pred_fallthru
      _
    %v29 = vld [vmem:[%s0] sm:$0xf]
    %v30 = vld [vmem:[%s2] sm:$0x7]
    %v31 = vld [vmem:[#allocation2] sm:$0xf]
    %v32 = vld [vmem:[#allocation2 + $0x4] sm:$0xf]
    %v33 = vld [vmem:[#allocation2 + $0x8] sm:$0xf]
    %v34 = vld [vmem:[#allocation2 + $0xc] sm:$0xf]
    %v35 = vld [vmem:[#allocation2 + $0x10] sm:$0xf]
    %v36 = vld [vmem:[#allocation2 + $0x14] sm:$0xf]
    %v37 = vld [vmem:[#allocation2 + $0x18] sm:$0xf]
    %v38 = vld [vmem:[#allocation2 + $0x1c] sm:$0xf]
    %v39 = vld [vmem:[#allocation2 + $0x20] sm:$0xf]
    %v40 = vld [vmem:[#allocation2 + $0x24] sm:$0xf]
    %v41 = vld [vmem:[#allocation2 + $0x28] sm:$0xf]
    %v42 = vld [vmem:[#allocation2 + $0x2c] sm:$0xf]
    %v43 = vld [vmem:[#allocation2 + $0x30] sm:$0xf]
    %v44 = vld [vmem:[#allocation2 + $0x34] sm:$0xf]
    %v45 = vld [vmem:[#allocation2 + $0x38] sm:$0xf]
    %v46 = vld [vmem:[#allocation2 + $0x3c] sm:$0xf]
    %v47 = vlaneseq
    %v48 = vshrl.u32 %v47, 7
    %v49 = vsub.s32 0, %v48
    %v50 = vrot.slane %v30, %v49
    %v67 = vunpack.c.l.b16 %v31
    %v68 = vunpack.c.l.b16 %v32
    %v69 = vunpack.c.l.b16 %v33
    %v70 = vunpack.c.l.b16 %v34
    %v71 = vunpack.c.l.b16 %v35
    %v72 = vunpack.c.l.b16 %v36
    %v73 = vunpack.c.l.b16 %v37
    %v74 = vunpack.c.l.b16 %v38
    %v75 = vunpack.c.l.b16 %v39
    %v76 = vunpack.c.l.b16 %v40
    %v77 = vunpack.c.l.b16 %v41
    %v78 = vunpack.c.l.b16 %v42
    %v79 = vunpack.c.l.b16 %v43
    %v80 = vunpack.c.l.b16 %v44
    %v81 = vunpack.c.l.b16 %v45
    %v82 = vunpack.c.l.b16 %v46
    %v83 = vpack.c.b16 %v68, %v67
    %v84 = vpack.c.b16 %v70, %v69
    %v85 = vpack.c.b16 %v72, %v71
    %v86 = vpack.c.b16 %v74, %v73
    %v87 = vpack.c.b16 %v76, %v75
    %v88 = vpack.c.b16 %v78, %v77
    %v89 = vpack.c.b16 %v80, %v79
    %v90 = vpack.c.b16 %v82, %v81
    %99 = vmatprep.subr.bf16.mxu0 0
    %100 = vmatpush1.bf16.msra.mxu0 %v83
    %101 = vmatprep.subr.bf16.mxu0 0
    %102 = vmatpush1.bf16.msra.mxu0 %v84
    %103 = vmatprep.subr.bf16.mxu0 0
    %104 = vmatpush1.bf16.msra.mxu0 %v85
    %105 = vmatprep.subr.bf16.mxu0 0
    %106 = vmatpush1.bf16.msra.mxu0 %v86
    %107 = vmatprep.subr.bf16.mxu0 0
    %108 = vmatpush1.bf16.msra.mxu0 %v87
    %109 = vmatprep.subr.bf16.mxu0 0
    %110 = vmatpush1.bf16.msra.mxu0 %v88
    %111 = vmatprep.subr.bf16.mxu0 0
    %112 = vmatpush1.bf16.msra.mxu0 %v89
    %113 = vmatprep.subr.bf16.mxu0 0
    %114 = vmatpush1.bf16.msra.mxu0 %v90
    %115 = vmatprep.subr.bf16.mxu0 0
    %116 = vmatpush1.bf16.msra.mxu0 0
    %117 = vmatprep.subr.bf16.mxu0 0
    %118 = vmatpush1.bf16.msra.mxu0 0
    %119 = vmatprep.subr.bf16.mxu0 0
    %120 = vmatpush1.bf16.msra.mxu0 0
    %121 = vmatprep.subr.bf16.mxu0 0
    %122 = vmatpush1.bf16.msra.mxu0 0
    %123 = vmatprep.subr.bf16.mxu0 0
    %124 = vmatpush1.bf16.msra.mxu0 0
    %125 = vmatprep.subr.bf16.mxu0 0
    %126 = vmatpush1.bf16.msra.mxu0 0
    %127 = vmatprep.subr.bf16.mxu0 0
    %128 = vmatpush1.bf16.msra.mxu0 0
    %129 = vmatprep.subr.bf16.mxu0 0
    %130 = vmatpush1.bf16.msra.mxu0 0
    %131 = vmatprep.mubr.bf16.mxu0 0
    %132 = vmatmul.mubr.bf16.gmra.mrb[0].mxu0 %v29
    %v133 = vpop.f32.mrb[0].mxu0
    %v134 = vadd.f32 %v50, %v133
    %v135 = vpop.f32.mrb[0].mxu0
    %v136 = vpop.f32.mrb[0].mxu0
    %v137 = vpop.f32.mrb[0].mxu0
    %138 = vdwg.mxu0
    %v139 = vmax.f32 %v134, 0.0
    %v140 = vpack.c.bf16 %v139, %v139
    %s141 = scalar_lea.vmem [#allocation2], 64
    %v142 = vld [vmem:[%s141] sm:$0xf]
    %v143 = vld [vmem:[%s141 + $0x4] sm:$0xf]
    %v144 = vld [vmem:[%s141 + $0x8] sm:$0xf]
    %v145 = vld [vmem:[%s141 + $0xc] sm:$0xf]
    %v146 = vld [vmem:[%s141 + $0x10] sm:$0xf]
    %v147 = vld [vmem:[%s141 + $0x14] sm:$0xf]
    %v148 = vld [vmem:[%s141 + $0x18] sm:$0xf]
    %v149 = vld [vmem:[%s141 + $0x1c] sm:$0xf]
    %v150 = vld [vmem:[%s141 + $0x20] sm:$0xf]
    %v151 = vld [vmem:[%s141 + $0x24] sm:$0xf]
    %v152 = vld [vmem:[%s141 + $0x28] sm:$0xf]
    %v153 = vld [vmem:[%s141 + $0x2c] sm:$0xf]
    %v154 = vld [vmem:[%s141 + $0x30] sm:$0xf]
    %v155 = vld [vmem:[%s141 + $0x34] sm:$0xf]
    %v156 = vld [vmem:[%s141 + $0x38] sm:$0xf]
    %v157 = vld [vmem:[%s141 + $0x3c] sm:$0xf]
    %v158 = vlaneseq
    %v159 = vshrl.u32 %v158, 7
    %v160 = vsub.s32 1, %v159
    %v161 = vrot.slane %v30, %v160
    %v178 = vunpack.c.l.b16 %v142
    %v179 = vunpack.c.l.b16 %v143
    %v180 = vunpack.c.l.b16 %v144
    %v181 = vunpack.c.l.b16 %v145
    %v182 = vunpack.c.l.b16 %v146
    %v183 = vunpack.c.l.b16 %v147
    %v184 = vunpack.c.l.b16 %v148
    %v185 = vunpack.c.l.b16 %v149
    %v186 = vunpack.c.l.b16 %v150
    %v187 = vunpack.c.l.b16 %v151
    %v188 = vunpack.c.l.b16 %v152
    %v189 = vunpack.c.l.b16 %v153
    %v190 = vunpack.c.l.b16 %v154
    %v191 = vunpack.c.l.b16 %v155
    %v192 = vunpack.c.l.b16 %v156
    %v193 = vunpack.c.l.b16 %v157
    %v194 = vpack.c.b16 %v179, %v178
    %v195 = vpack.c.b16 %v181, %v180
    %v196 = vpack.c.b16 %v183, %v182
    %v197 = vpack.c.b16 %v185, %v184
    %v198 = vpack.c.b16 %v187, %v186
    %v199 = vpack.c.b16 %v189, %v188
    %v200 = vpack.c.b16 %v191, %v190
    %v201 = vpack.c.b16 %v193, %v192
    %210 = vmatprep.subr.bf16.mxu0 0
    %211 = vmatpush1.bf16.msra.mxu0 %v194
    %212 = vmatprep.subr.bf16.mxu0 0
    %213 = vmatpush1.bf16.msra.mxu0 %v195
    %214 = vmatprep.subr.bf16.mxu0 0
    %215 = vmatpush1.bf16.msra.mxu0 %v196
    %216 = vmatprep.subr.bf16.mxu0 0
    %217 = vmatpush1.bf16.msra.mxu0 %v197
    %218 = vmatprep.subr.bf16.mxu0 0
    %219 = vmatpush1.bf16.msra.mxu0 %v198
    %220 = vmatprep.subr.bf16.mxu0 0
    %221 = vmatpush1.bf16.msra.mxu0 %v199
    %222 = vmatprep.subr.bf16.mxu0 0
    %223 = vmatpush1.bf16.msra.mxu0 %v200
    %224 = vmatprep.subr.bf16.mxu0 0
    %225 = vmatpush1.bf16.msra.mxu0 %v201
    %226 = vmatprep.subr.bf16.mxu0 0
    %227 = vmatpush1.bf16.msra.mxu0 0
    %228 = vmatprep.subr.bf16.mxu0 0
    %229 = vmatpush1.bf16.msra.mxu0 0
    %230 = vmatprep.subr.bf16.mxu0 0
    %231 = vmatpush1.bf16.msra.mxu0 0
    %232 = vmatprep.subr.bf16.mxu0 0
    %233 = vmatpush1.bf16.msra.mxu0 0
    %234 = vmatprep.subr.bf16.mxu0 0
    %235 = vmatpush1.bf16.msra.mxu0 0
    %236 = vmatprep.subr.bf16.mxu0 0
    %237 = vmatpush1.bf16.msra.mxu0 0
    %238 = vmatprep.subr.bf16.mxu0 0
    %239 = vmatpush1.bf16.msra.mxu0 0
    %240 = vmatprep.subr.bf16.mxu0 0
    %241 = vmatpush1.bf16.msra.mxu0 0
    %242 = vmatprep.mubr.bf16.mxu0 0
    %243 = vmatmul.mubr.bf16.gmra.mrb[0].mxu0 %v140
    %v244 = vpop.f32.mrb[0].mxu0
    %v245 = vadd.f32 %v161, %v244
    %v246 = vpop.f32.mrb[0].mxu0
    %v247 = vpop.f32.mrb[0].mxu0
    %v248 = vpop.f32.mrb[0].mxu0
    %249 = vdwg.mxu0
    %v250 = vmax.f32 %v245, 0.0
    %v251 = vpack.c.bf16 %v250, %v250
    %s252 = scalar_lea.vmem [#allocation2], 128
    %v253 = vld [vmem:[%s252] sm:$0xf]
    %v254 = vld [vmem:[%s252 + $0x4] sm:$0xf]
    %v255 = vld [vmem:[%s252 + $0x8] sm:$0xf]
    %v256 = vld [vmem:[%s252 + $0xc] sm:$0xf]
    %v257 = vld [vmem:[%s252 + $0x10] sm:$0xf]
    %v258 = vld [vmem:[%s252 + $0x14] sm:$0xf]
    %v259 = vld [vmem:[%s252 + $0x18] sm:$0xf]
    %v260 = vld [vmem:[%s252 + $0x1c] sm:$0xf]
    %v261 = vld [vmem:[%s252 + $0x20] sm:$0xf]
    %v262 = vld [vmem:[%s252 + $0x24] sm:$0xf]
    %v263 = vld [vmem:[%s252 + $0x28] sm:$0xf]
    %v264 = vld [vmem:[%s252 + $0x2c] sm:$0xf]
    %v265 = vld [vmem:[%s252 + $0x30] sm:$0xf]
    %v266 = vld [vmem:[%s252 + $0x34] sm:$0xf]
    %v267 = vld [vmem:[%s252 + $0x38] sm:$0xf]
    %v268 = vld [vmem:[%s252 + $0x3c] sm:$0xf]
    %v269 = vlaneseq
    %v270 = vshrl.u32 %v269, 7
    %v271 = vsub.s32 2, %v270
    %v272 = vrot.slane %v30, %v271
    %v289 = vunpack.c.l.b16 %v253
    %v290 = vunpack.c.l.b16 %v254
    %v291 = vunpack.c.l.b16 %v255
    %v292 = vunpack.c.l.b16 %v256
    %v293 = vunpack.c.l.b16 %v257
    %v294 = vunpack.c.l.b16 %v258
    %v295 = vunpack.c.l.b16 %v259
    %v296 = vunpack.c.l.b16 %v260
    %v297 = vunpack.c.l.b16 %v261
    %v298 = vunpack.c.l.b16 %v262
    %v299 = vunpack.c.l.b16 %v263
    %v300 = vunpack.c.l.b16 %v264
    %v301 = vunpack.c.l.b16 %v265
    %v302 = vunpack.c.l.b16 %v266
    %v303 = vunpack.c.l.b16 %v267
    %v304 = vunpack.c.l.b16 %v268
    %v305 = vpack.c.b16 %v290, %v289
    %v306 = vpack.c.b16 %v292, %v291
    %v307 = vpack.c.b16 %v294, %v293
    %v308 = vpack.c.b16 %v296, %v295
    %v309 = vpack.c.b16 %v298, %v297
    %v310 = vpack.c.b16 %v300, %v299
    %v311 = vpack.c.b16 %v302, %v301
    %v312 = vpack.c.b16 %v304, %v303
    %321 = vmatprep.subr.bf16.mxu0 0
    %322 = vmatpush1.bf16.msra.mxu0 %v305
    %323 = vmatprep.subr.bf16.mxu0 0
    %324 = vmatpush1.bf16.msra.mxu0 %v306
    %325 = vmatprep.subr.bf16.mxu0 0
    %326 = vmatpush1.bf16.msra.mxu0 %v307
    %327 = vmatprep.subr.bf16.mxu0 0
    %328 = vmatpush1.bf16.msra.mxu0 %v308
    %329 = vmatprep.subr.bf16.mxu0 0
    %330 = vmatpush1.bf16.msra.mxu0 %v309
    %331 = vmatprep.subr.bf16.mxu0 0
    %332 = vmatpush1.bf16.msra.mxu0 %v310
    %333 = vmatprep.subr.bf16.mxu0 0
    %334 = vmatpush1.bf16.msra.mxu0 %v311
    %335 = vmatprep.subr.bf16.mxu0 0
    %336 = vmatpush1.bf16.msra.mxu0 %v312
    %337 = vmatprep.subr.bf16.mxu0 0
    %338 = vmatpush1.bf16.msra.mxu0 0
    %339 = vmatprep.subr.bf16.mxu0 0
    %340 = vmatpush1.bf16.msra.mxu0 0
    %341 = vmatprep.subr.bf16.mxu0 0
    %342 = vmatpush1.bf16.msra.mxu0 0
    %343 = vmatprep.subr.bf16.mxu0 0
    %344 = vmatpush1.bf16.msra.mxu0 0
    %345 = vmatprep.subr.bf16.mxu0 0
    %346 = vmatpush1.bf16.msra.mxu0 0
    %347 = vmatprep.subr.bf16.mxu0 0
    %348 = vmatpush1.bf16.msra.mxu0 0
    %349 = vmatprep.subr.bf16.mxu0 0
    %350 = vmatpush1.bf16.msra.mxu0 0
    %351 = vmatprep.subr.bf16.mxu0 0
    %352 = vmatpush1.bf16.msra.mxu0 0
    %353 = vmatprep.mubr.bf16.mxu0 0
    %354 = vmatmul.mubr.bf16.gmra.mrb[0].mxu0 %v251
    %v355 = vpop.f32.mrb[0].mxu0
    %v356 = vadd.f32 %v272, %v355
    %v357 = vpop.f32.mrb[0].mxu0
    %v358 = vpop.f32.mrb[0].mxu0
    %v359 = vpop.f32.mrb[0].mxu0
    %360 = vdwg.mxu0
    %361 = vst [vmem:[%s3] sm:$0xff] %v356
    // Predicated region
    $region18: #{dqn_forward.1} parent=1 // pred_check
      _
    $region19: #{dqn_forward.1} parent=1 // pred_check_branch
      %363 = sbr.rel (0) target = $region21
    $region20: #{dqn_forward.1} parent=1 // pred_region
      _
    $region21: #{dqn_forward.1} parent=1 // pred_fallthru
      _
    // Predicated region
    $region22: #{dqn_forward.1} parent=1 // pred_check
      _
    $region23: #{dqn_forward.1} parent=1 // pred_check_branch
      %365 = sbr.rel (0) target = $region25
    $region24: #{dqn_forward.1} parent=1 // pred_region
      _
    $region25: #{dqn_forward.1} parent=1 // pred_fallthru
      _
    %366 = vsyncpa [#allocation3], 1

</llo_original>
